<compile_context>
chip_gen: v5e
topology: v5e:2x2
jax: 0.10.0
libtpu: 0.0.40
codegen_flags: <defaults>
</compile_context>

<pallas_src>
import functools

import jax
import jax.numpy as jnp
from jax.experimental import pallas as pl
from jax.experimental.pallas import tpu as pltpu

NUM_CLASSES = 10
HIDDEN = 50
HIDDEN_PAD = 128   # hidden dim padded to the 128-wide lane / MXU width
OUT_W = 16         # output dim padded 10 -> 16 (zero-pad; sliced in wrapper)


def mlp_kernel(x_ref, w1_ref, b1_ref, w2_ref, b2_ref, o_ref):
    # Two MXU matmuls (bf16 in, f32 accumulate) + bias add + ReLU, fused in
    # VMEM for one batch tile.
    x = x_ref[...]
    h = jnp.dot(x, w1_ref[...], preferred_element_type=jnp.float32) + b1_ref[...]
    h = jnp.maximum(h, 0.0)                                    # ReLU (f32)
    y = jnp.dot(h.astype(w2_ref.dtype), w2_ref[...],
                preferred_element_type=jnp.float32) + b2_ref[...]
    o_ref[...] = y.astype(o_ref.dtype)


def _round_up(v, m):
    return (v + m - 1) // m * m


def _choose_block_b(batch, input_size, x_bytes):
    """Batch tile: fits a conservative VMEM budget, multiple of 8 sublanes,
    and keeps the grid at >=2 (ideally >=8) steps for megacore / pipelining."""
    in_pad = _round_up(max(input_size, 1), 128)
    out_lane_pad = _round_up(OUT_W, 128)
    # Double-buffered streamed tiles, lane-padded VMEM footprint per row.
    per_row = 2 * (in_pad * x_bytes + out_lane_pad * 4)
    budget = 8 * 1024 * 1024
    tb = budget // max(per_row, 1)
    tb = min(tb, 2048)

    b8 = _round_up(batch, 8)
    if b8 >= 8 * 64:
        tb = min(tb, b8 // 8)      # >=8 grid steps: pipeline overlap
    elif b8 >= 16:
        tb = min(tb, b8 // 2)      # >=2 grid steps: both v7x TensorCores busy
    tb = min(tb, b8)
    return max(8, (tb // 8) * 8)


def _vmem_bytes_needed(tb, input_size, x_bytes, w_bytes):
    """Lane/sublane-padded VMEM footprint: double-buffered streamed tiles plus
    the (also double-buffered by default) resident weights/biases."""
    in_pad = _round_up(max(input_size, 1), 128)
    x_tile = tb * in_pad * x_bytes
    out_tile = tb * _round_up(OUT_W, 128) * 4
    w1 = _round_up(input_size, 8) * HIDDEN_PAD * w_bytes
    w2 = HIDDEN_PAD * _round_up(OUT_W, 128) * w_bytes
    b1 = 8 * HIDDEN_PAD * 4
    b2 = 8 * _round_up(OUT_W, 128) * 4
    return 2 * (x_tile + out_tile) + 2 * (w1 + w2 + b1 + b2)


def prepare_params(w1, b1, w2, b2, compute_dtype=jnp.bfloat16):
    """One-time (off the hot path) zero-pad + cast of the tiny weights.
    Zero padding is numerically exact: ReLU(0)=0 and zero w2 rows add 0."""
    in_size, n_hidden = w1.shape
    n_classes = w2.shape[1]
    w1p = jnp.zeros((in_size, HIDDEN_PAD), compute_dtype)
    w1p = w1p.at[:, :n_hidden].set(w1.astype(compute_dtype))
    b1p = jnp.zeros((1, HIDDEN_PAD), jnp.float32)
    b1p = b1p.at[:, :n_hidden].set(b1.reshape(1, -1).astype(jnp.float32))
    w2p = jnp.zeros((HIDDEN_PAD, OUT_W), compute_dtype)
    w2p = w2p.at[:n_hidden, :n_classes].set(w2.astype(compute_dtype))
    b2p = jnp.zeros((1, OUT_W), jnp.float32)
    b2p = b2p.at[:, :n_classes].set(b2.reshape(1, -1).astype(jnp.float32))
    return w1p, b1p, w2p, b2p


@functools.partial(jax.jit, static_argnames=("n_classes",))
def nn_forward(x, w1p, b1p, w2p, b2p, n_classes=NUM_CLASSES):
    """x: (B, input_size); prepared params from prepare_params().
    Returns (B, n_classes) float32 — same math as NN.forward."""
    B, in_size = x.shape
    compute_dtype = w1p.dtype
    if x.dtype != compute_dtype:
        x = x.astype(compute_dtype)   # halves the x HBM stream; fused under jit
    x_bytes = jnp.dtype(compute_dtype).itemsize
    w_bytes = jnp.dtype(w1p.dtype).itemsize

    tb = _choose_block_b(B, in_size, x_bytes)
    grid = (pl.cdiv(B, tb),)          # ragged tail handled by Pallas (no jnp.pad)

    needed = _vmem_bytes_needed(tb, in_size, x_bytes, w_bytes)
    vmem_limit = int(min(max(2 * needed + (1 << 20), 16 << 20), 64 << 20))

    cost = pl.CostEstimate(
        flops=2 * B * (in_size * HIDDEN_PAD + HIDDEN_PAD * OUT_W),
        transcendentals=0,
        bytes_accessed=(B * in_size * x_bytes
                        + in_size * HIDDEN_PAD * w_bytes
                        + HIDDEN_PAD * OUT_W * w_bytes
                        + (HIDDEN_PAD + OUT_W) * 4
                        + B * OUT_W * 4),
    )

    out = pl.pallas_call(
        mlp_kernel,
        out_shape=jax.ShapeDtypeStruct((B, OUT_W), jnp.float32),
        grid=grid,
        in_specs=[
            pl.BlockSpec((tb, in_size), lambda i: (i, 0)),          # x streams
            pl.BlockSpec((in_size, HIDDEN_PAD), lambda i: (0, 0)),  # w1 resident
            pl.BlockSpec((1, HIDDEN_PAD), lambda i: (0, 0)),        # b1 resident
            pl.BlockSpec((HIDDEN_PAD, OUT_W), lambda i: (0, 0)),    # w2 resident
            pl.BlockSpec((1, OUT_W), lambda i: (0, 0)),             # b2 resident
        ],
        out_specs=pl.BlockSpec((tb, OUT_W), lambda i: (i, 0)),
        compiler_params=pltpu.CompilerParams(
            dimension_semantics=("parallel",),
            vmem_limit_bytes=vmem_limit),
        cost_estimate=cost,
    )(x, w1p, b1p, w2p, b2p)

    return out[:, :n_classes]


def init_params(key, input_size, num_classes):
    # Deterministic init mimicking nn.Linear's U(-1/sqrt(fan_in), 1/sqrt(fan_in)).
    k1, k2, k3, k4 = jax.random.split(key, 4)
    bound1 = 1.0 / jnp.sqrt(jnp.float32(input_size))
    bound2 = 1.0 / jnp.sqrt(jnp.float32(HIDDEN))
    w1 = jax.random.uniform(k1, (input_size, HIDDEN), jnp.float32, -bound1, bound1)
    b1 = jax.random.uniform(k2, (1, HIDDEN), jnp.float32, -bound1, bound1)
    w2 = jax.random.uniform(k3, (HIDDEN, num_classes), jnp.float32, -bound2, bound2)
    b2 = jax.random.uniform(k4, (1, num_classes), jnp.float32, -bound2, bound2)
    return w1, b1, w2, b2


if __name__ == "__main__":
    key = jax.random.PRNGKey(0)
    kx, kp = jax.random.split(key)

    batch = 8
    input_size = 32  # small synthetic feature size (module is agnostic to it)

    x = jax.random.normal(kx, (batch, input_size), jnp.float32)
    w1, b1, w2, b2 = init_params(kp, input_size, NUM_CLASSES)

    # Pad + cast the weights ONCE (off the per-forward path).
    w1p, b1p, w2p, b2p = prepare_params(w1, b1, w2, b2)

    out = nn_forward(x, w1p, b1p, w2p, b2p, n_classes=NUM_CLASSES)
    out = jax.block_until_ready(out)

    # Reference in plain JAX with matching bf16 rounding of x / weights / h.
    f32 = jnp.float32
    xb = x.astype(jnp.bfloat16).astype(f32)
    w1b = w1.astype(jnp.bfloat16).astype(f32)
    w2b = w2.astype(jnp.bfloat16).astype(f32)
    h = jnp.maximum(xb @ w1b + b1, 0.0).astype(jnp.bfloat16).astype(f32)
    ref = h @ w2b + b2

    assert out.shape == (batch, NUM_CLASSES)
    assert jnp.allclose(out, ref, atol=1e-2, rtol=1e-2)

    print("KERNEL_OK")
</pallas_src>

<mosaic_0001>
module attributes {stable_mosaic.version = 11 : i64} {
  func.func @mlp_kernel(%arg0: i32, %arg1: memref<8x32xbf16, #tpu.memory_space<vmem>>, %arg2: memref<32x128xbf16, #tpu.memory_space<vmem>>, %arg3: memref<1x128xf32, #tpu.memory_space<vmem>>, %arg4: memref<128x16xbf16, #tpu.memory_space<vmem>>, %arg5: memref<1x16xf32, #tpu.memory_space<vmem>>, %arg6: memref<8x16xf32, #tpu.memory_space<vmem>>) attributes {dimension_semantics = [#tpu.dimension_semantics<parallel>], iteration_bounds = array<i64: 1>, scalar_prefetch = 0 : i64, scratch_operands = 0 : i64, tpu.core_type = #tpu.core_type<tc>, window_params = [{transform_indices = @transform_0, window_bounds = array<i64: 8, 32>}, {pipeline_mode = #tpu.pipeline_mode<synchronous>, transform_indices = @transform_1, window_bounds = array<i64: 32, 128>}, {pipeline_mode = #tpu.pipeline_mode<synchronous>, transform_indices = @transform_2, window_bounds = array<i64: 1, 128>}, {pipeline_mode = #tpu.pipeline_mode<synchronous>, transform_indices = @transform_3, window_bounds = array<i64: 128, 16>}, {pipeline_mode = #tpu.pipeline_mode<synchronous>, transform_indices = @transform_4, window_bounds = array<i64: 1, 16>}, {transform_indices = @transform_5, window_bounds = array<i64: 8, 16>}]} {
    %c0 = arith.constant 0 : index
    %c0_0 = arith.constant 0 : index
    %0 = vector.load %arg1[%c0, %c0_0] : memref<8x32xbf16, #tpu.memory_space<vmem>>, vector<8x32xbf16>
    %c0_1 = arith.constant 0 : index
    %c0_2 = arith.constant 0 : index
    %1 = vector.load %arg2[%c0_1, %c0_2] : memref<32x128xbf16, #tpu.memory_space<vmem>>, vector<32x128xbf16>
    %cst = arith.constant dense<0.000000e+00> : vector<8x128xf32>
    %2 = tpu.matmul %0, %1, %cst {dimension_numbers = #tpu.dot_dimension_numbers<[1], [0], [0], [1], [0, 0, 1, 1], [], []>} : vector<8x32xbf16>, vector<32x128xbf16>, vector<8x128xf32> -> vector<8x128xf32>
    %c0_3 = arith.constant 0 : index
    %c0_4 = arith.constant 0 : index
    %3 = vector.load %arg3[%c0_3, %c0_4] : memref<1x128xf32, #tpu.memory_space<vmem>>, vector<1x128xf32>
    %4 = vector.broadcast %3 : vector<1x128xf32> to vector<8x128xf32>
    %5 = arith.addf %2, %4 : vector<8x128xf32>
    %cst_5 = arith.constant 0.000000e+00 : f32
    %6 = vector.broadcast %cst_5 : f32 to vector<8x128xf32>
    %7 = arith.maximumf %5, %6 : vector<8x128xf32>
    %8 = arith.truncf %7 : vector<8x128xf32> to vector<8x128xbf16>
    %c0_6 = arith.constant 0 : index
    %c0_7 = arith.constant 0 : index
    %9 = vector.load %arg4[%c0_6, %c0_7] : memref<128x16xbf16, #tpu.memory_space<vmem>>, vector<128x16xbf16>
    %cst_8 = arith.constant dense<0.000000e+00> : vector<8x16xf32>
    %10 = tpu.matmul %8, %9, %cst_8 {dimension_numbers = #tpu.dot_dimension_numbers<[1], [0], [0], [1], [0, 0, 1, 1], [], []>} : vector<8x128xbf16>, vector<128x16xbf16>, vector<8x16xf32> -> vector<8x16xf32>
    %c0_9 = arith.constant 0 : index
    %c0_10 = arith.constant 0 : index
    %11 = vector.load %arg5[%c0_9, %c0_10] : memref<1x16xf32, #tpu.memory_space<vmem>>, vector<1x16xf32>
    %12 = vector.broadcast %11 : vector<1x16xf32> to vector<8x16xf32>
    %13 = arith.addf %10, %12 : vector<8x16xf32>
    %c0_11 = arith.constant 0 : index
    %c0_12 = arith.constant 0 : index
    %14 = vector.load %arg6[%c0_11, %c0_12] : memref<8x16xf32, #tpu.memory_space<vmem>>, vector<8x16xf32>
    tpu.vector_store %arg6[%c0_11, %c0_12], %13 {strides = array<i32>} : memref<8x16xf32, #tpu.memory_space<vmem>>, vector<8x16xf32>,
    return
  }
  func.func @transform_0(%arg0: i32) -> (i32, i32) {
    %c0_i32 = arith.constant 0 : i32
    %c0_i32_0 = arith.constant 0 : i32
    return %arg0, %c0_i32 : i32, i32
  }
  func.func @transform_1(%arg0: i32) -> (i32, i32) {
    %c0_i32 = arith.constant 0 : i32
    %c0_i32_0 = arith.constant 0 : i32
    %c0_i32_1 = arith.constant 0 : i32
    return %c0_i32, %c0_i32_0 : i32, i32
  }
  func.func @transform_2(%arg0: i32) -> (i32, i32) {
    %c0_i32 = arith.constant 0 : i32
    %c0_i32_0 = arith.constant 0 : i32
    %c0_i32_1 = arith.constant 0 : i32
    return %c0_i32, %c0_i32_0 : i32, i32
  }
  func.func @transform_3(%arg0: i32) -> (i32, i32) {
    %c0_i32 = arith.constant 0 : i32
    %c0_i32_0 = arith.constant 0 : i32
    %c0_i32_1 = arith.constant 0 : i32
    return %c0_i32, %c0_i32_0 : i32, i32
  }
  func.func @transform_4(%arg0: i32) -> (i32, i32) {
    %c0_i32 = arith.constant 0 : i32
    %c0_i32_0 = arith.constant 0 : i32
    %c0_i32_1 = arith.constant 0 : i32
    return %c0_i32, %c0_i32_0 : i32, i32
  }
  func.func @transform_5(%arg0: i32) -> (i32, i32) {
    %c0_i32 = arith.constant 0 : i32
    %c0_i32_0 = arith.constant 0 : i32
    return %arg0, %c0_i32 : i32, i32
  }
}

</mosaic_0001>

<llo_original>
// kernel: nn_forward.1
$region0: #{nn_forward.1}
  #allocation0 [shape = 'u32[]', space=smem, size = 0x4, offset = 0x4, fixed_abs, tag = 'smem constant byte address 0x4 - core index']
  #allocation1 [shape = 'u32[72,128]{1,0:T(1,128)}', space=vmem, size = 0x9000, scoped, tag = 'internal scratch']
  %s0 = inlined_call_operand.vmem [shape: bf16[8,32], index: 0, kind: input, shape index: {}]
  %s1 = inlined_call_operand.vmem [shape: bf16[32,128], index: 1, kind: input, shape index: {}]
  %s2 = inlined_call_operand.vmem [shape: f32[1,128], index: 2, kind: input, shape index: {}]
  %s3 = inlined_call_operand.vmem [shape: bf16[128,16], index: 3, kind: input, shape index: {}]
  %s4 = inlined_call_operand.vmem [shape: f32[1,16], index: 4, kind: input, shape index: {}]
  %s5 = inlined_call_operand.hbm [shape: f32[8,16], index: 5, kind: output, shape index: {}]
  %s6 = sld [smem:[#allocation0]]
  $region30: #{nn_forward.1} parent=0
    _
  %s8 = ssub.s32 1, %s6
  %s9 = scalar_select 0, %s8, %s6
  $region1: #{nn_forward.1} parent=0
    #allocation2 [shape = 'u8[4096]{0}', space=vmem, size = 0x1000, scoped, tag = 'output window, operand 0, single buffered']
    #allocation3 [shape = 's32[1]{0}', space=sflag, size = 0x4, scoped, tag = 'scoped memory for nn_forward.1']
    %10 = vsyncpa [#allocation3], 0
    // Predicated region
    $region2: #{nn_forward.1} parent=1 // pred_check
      _
    $region3: #{nn_forward.1} parent=1 // pred_check_branch
      %12 = sbr.rel (0) target = $region5
    $region4: #{nn_forward.1} parent=1 // pred_region
      _
    $region5: #{nn_forward.1} parent=1 // pred_fallthru
      _
    // Predicated region
    $region6: #{nn_forward.1} parent=1 // pred_check
      _
    $region7: #{nn_forward.1} parent=1 // pred_check_branch
      %14 = sbr.rel (0) target = $region9
    $region8: #{nn_forward.1} parent=1 // pred_region
      _
    $region9: #{nn_forward.1} parent=1 // pred_fallthru
      _
    // Predicated region
    $region10: #{nn_forward.1} parent=1 // pred_check
      _
    $region11: #{nn_forward.1} parent=1 // pred_check_branch
      %16 = sbr.rel (0) target = $region13
    $region12: #{nn_forward.1} parent=1 // pred_region
      _
    $region13: #{nn_forward.1} parent=1 // pred_fallthru
      _
    // Predicated region
    $region14: #{nn_forward.1} parent=1 // pred_check
      _
    $region15: #{nn_forward.1} parent=1 // pred_check_branch
      %18 = sbr.rel (0) target = $region17
    $region16: #{nn_forward.1} parent=1 // pred_region
      _
    $region17: #{nn_forward.1} parent=1 // pred_fallthru
      _
    // Predicated region
    $region18: #{nn_forward.1} parent=1 // pred_check
      _
    $region19: #{nn_forward.1} parent=1 // pred_check_branch
      %20 = sbr.rel (0) target = $region21
    $region20: #{nn_forward.1} parent=1 // pred_region
      _
    $region21: #{nn_forward.1} parent=1 // pred_fallthru
      _
    %v22 = vld [vmem:[%s0] sm:$0xf]
    %v23 = vld [vmem:[%s1] sm:$0xf]
    %v24 = vld [vmem:[%s1 + $0x4] sm:$0xf]
    %v25 = vld [vmem:[%s1 + $0x8] sm:$0xf]
    %v26 = vld [vmem:[%s1 + $0xc] sm:$0xf]
    %v27 = vld [vmem:[%s2] sm:$0x1]
    %v29 = vperm.slane %v27, 0
    %v35 = vunpack.c.l.b16 %v23
    %v36 = vunpack.c.l.b16 %v24
    %v37 = vunpack.c.l.b16 %v25
    %v38 = vunpack.c.l.b16 %v26
    %v39 = vpack.c.b16 %v36, %v35
    %v40 = vpack.c.b16 %v38, %v37
    %vm43 = vcmask 261120
    %v45 = vsel %vm43, %v22, 0
    %47 = vmatpush.bf16.msra.mxu0 0
    %48 = vmatpush.bf16.msra.mxu0 0
    %49 = vmatpush.bf16.msra.mxu0 0
    %50 = vmatpush.bf16.msra.mxu0 0
    %51 = vmatpush.bf16.msra.mxu0 0
    %52 = vmatpush.bf16.msra.mxu0 0
    %53 = vmatpush.bf16.msra.mxu0 %v40
    %54 = vmatpush.bf16.msra.mxu0 %v39
    %55 = vmatmul.bf16.gmra.mxu0 %v45
    %v56 = vpop.f32.mrf.mxu0
    %v57 = vadd.f32 %v29, %v56
    %v58 = vpop.f32.mrf.mxu0
    %59 = vdwg.mxu0
    %v60 = vmax.f32 %v57, 0.0
    %v61 = vpack.c.bf16 %v60, %v60
    %v62 = vld [vmem:[%s3] sm:$0xf]
    %v63 = vld [vmem:[%s3 + $0x4] sm:$0xf]
    %v64 = vld [vmem:[%s3 + $0x8] sm:$0xf]
    %v65 = vld [vmem:[%s3 + $0xc] sm:$0xf]
    %v66 = vld [vmem:[%s3 + $0x10] sm:$0xf]
    %v67 = vld [vmem:[%s3 + $0x14] sm:$0xf]
    %v68 = vld [vmem:[%s3 + $0x18] sm:$0xf]
    %v69 = vld [vmem:[%s3 + $0x1c] sm:$0xf]
    %v70 = vld [vmem:[%s3 + $0x20] sm:$0xf]
    %v71 = vld [vmem:[%s3 + $0x24] sm:$0xf]
    %v72 = vld [vmem:[%s3 + $0x28] sm:$0xf]
    %v73 = vld [vmem:[%s3 + $0x2c] sm:$0xf]
    %v74 = vld [vmem:[%s3 + $0x30] sm:$0xf]
    %v75 = vld [vmem:[%s3 + $0x34] sm:$0xf]
    %v76 = vld [vmem:[%s3 + $0x38] sm:$0xf]
    %v77 = vld [vmem:[%s3 + $0x3c] sm:$0xf]
    %v78 = vld [vmem:[%s4] sm:$0x1]
    %v80 = vperm.slane %v78, 0
    %v98 = vunpack.c.l.b16 %v62
    %v99 = vunpack.c.l.b16 %v63
    %v100 = vunpack.c.l.b16 %v64
    %v101 = vunpack.c.l.b16 %v65
    %v102 = vunpack.c.l.b16 %v66
    %v103 = vunpack.c.l.b16 %v67
    %v104 = vunpack.c.l.b16 %v68
    %v105 = vunpack.c.l.b16 %v69
    %v106 = vunpack.c.l.b16 %v70
    %v107 = vunpack.c.l.b16 %v71
    %v108 = vunpack.c.l.b16 %v72
    %v109 = vunpack.c.l.b16 %v73
    %v110 = vunpack.c.l.b16 %v74
    %v111 = vunpack.c.l.b16 %v75
    %v112 = vunpack.c.l.b16 %v76
    %v113 = vunpack.c.l.b16 %v77
    %v114 = vpack.c.b16 %v99, %v98
    %v115 = vpack.c.b16 %v101, %v100
    %v116 = vpack.c.b16 %v103, %v102
    %v117 = vpack.c.b16 %v105, %v104
    %v118 = vpack.c.b16 %v107, %v106
    %v119 = vpack.c.b16 %v109, %v108
    %v120 = vpack.c.b16 %v111, %v110
    %v121 = vpack.c.b16 %v113, %v112
    %130 = vmatpush.bf16.msra.mxu0 %v121
    %131 = vmatpush.bf16.msra.mxu0 %v120
    %132 = vmatpush.bf16.msra.mxu0 %v119
    %133 = vmatpush.bf16.msra.mxu0 %v118
    %134 = vmatpush.bf16.msra.mxu0 %v117
    %135 = vmatpush.bf16.msra.mxu0 %v116
    %136 = vmatpush.bf16.msra.mxu0 %v115
    %137 = vmatpush.bf16.msra.mxu0 %v114
    %138 = vmatmul.bf16.gmra.mxu0 %v61
    %v139 = vpop.f32.mrf.mxu0
    %v140 = vadd.f32 %v80, %v139
    %v141 = vpop.f32.mrf.mxu0
    %142 = vdwg.mxu0
    %vm143 = vcmask 130048
    %144 = vst.msk [vmem:[#allocation2] sm:$0xff] %vm143, %v140
    // Predicated region
    $region22: #{nn_forward.1} parent=1 // pred_check
      _
    $region23: #{nn_forward.1} parent=1 // pred_check_branch
      %146 = sbr.rel (0) target = $region25
    $region24: #{nn_forward.1} parent=1 // pred_region
      %148 = vsyncadd [#allocation3], 0
      %s150 = sshll.u32 [#allocation2], 4
      %s151 = int_to_ptr.vmem [resolvable:$true] %s150
      %s152 = sshll.u32 %s5, 4
      %s153 = int_to_ptr.hbm [resolvable:$true] %s152
      %155 = dma.vmem_to_hbm [thread:$0]  %s151, 128, %s153, [#allocation3]
    $region25: #{nn_forward.1} parent=1 // pred_fallthru
      _
    // Predicated region
    $region26: #{nn_forward.1} parent=1 // pred_check
      _
    $region27: #{nn_forward.1} parent=1 // pred_check_branch
      %157 = sbr.rel (0) target = $region29
    $region28: #{nn_forward.1} parent=1 // pred_region
      %159 = dma.done [#allocation3], 128
    $region29: #{nn_forward.1} parent=1 // pred_fallthru
      _
    %160 = vsyncpa [#allocation3], 1

</llo_original>
